<compile_context>
chip_gen: v7x
topology: tpu7x:2x2x1
jax: 0.10.0
libtpu: 0.0.40
codegen_flags: <defaults>
</compile_context>

<pallas_src>
import functools

import jax
import jax.numpy as jnp
from jax.experimental import pallas as pl
from jax.experimental.pallas import tpu as pltpu


def _round_up(x, m):
    return (x + m - 1) // m * m


def _prenet_fused_kernel(p, n_layers, layer_stride, seed_ref, x_ref, w_ref,
                         b_ref, o_ref):
    """Fused Prenet: h -> dropout(relu(h @ W_l^T + b_l), p) for l = 0..n_layers-1.

    p, n_layers, layer_stride : Python constants closed over at trace time.
    seed_ref : SMEM (1,) int32            -- dropout base seed
    x_ref    : VMEM (tm, F) bf16          -- activation row tile (features padded to F)
    w_ref    : VMEM (n_layers, F, F) bf16 -- pre-transposed, zero-padded weights
    b_ref    : VMEM (n_layers, 1, F) f32  -- zero-padded biases
    o_ref    : VMEM (tm, F) f32           -- output row tile
    """
    tm, F = x_ref.shape
    h = x_ref[...]                                    # bf16 activations

    if p > 0.0:
        # Per-element counters, unique across the whole (layer, row, col) space.
        row0 = pl.program_id(0) * tm
        rows = jax.lax.broadcasted_iota(jnp.int32, (tm, F), 0) + row0
        cols = jax.lax.broadcasted_iota(jnp.int32, (tm, F), 1)
        base_ctr = rows.astype(jnp.uint32) * jnp.uint32(F) + cols.astype(jnp.uint32)
        seed_u = seed_ref[0].astype(jnp.uint32)
        inv_keep = jnp.float32(1.0 / (1.0 - p))
        thr = jnp.uint32(min(int(p * 4294967296.0), 4294967295))

    y = None
    for l in range(n_layers):                         # small, unrolled at trace time
        # MXU matmul, bf16 inputs, f32 accumulation.
        y = jnp.dot(h, w_ref[l], preferred_element_type=jnp.float32)
        y = y + b_ref[l]                              # (1, F) broadcasts over rows
        y = jnp.maximum(y, 0.0)                       # ReLU (f32)

        if p > 0.0:
            # Counter-based RNG: unique counter per (layer, row, col) -> splitmix32-style mix.
            ctr = base_ctr + jnp.uint32((l * layer_stride) & 0xFFFFFFFF)
            ctr = ctr * jnp.uint32(2654435761) + seed_u
            ctr = ctr ^ (ctr >> 16)
            ctr = ctr * jnp.uint32(0x7FEB352D)
            ctr = ctr ^ (ctr >> 15)
            ctr = ctr * jnp.uint32(0x846CA68B)
            ctr = ctr ^ (ctr >> 16)
            keep = ctr >= thr                         # P(drop) == p
            y = jnp.where(keep, y * inv_keep, 0.0)    # inverted dropout, f32

        if l + 1 < n_layers:
            h = y.astype(jnp.bfloat16)                # feed next layer's MXU in bf16

    o_ref[...] = y.astype(o_ref.dtype)


def prenet_forward(x, params, dropout_p, seed=0, tm=512):
    """x: (B, T, in_dim) f32.  params: list of (W (out,in), b (out,)) f32 per layer."""
    assert 0.0 <= float(dropout_p) < 1.0, "dropout_p must be in [0, 1)"
    assert len(params) >= 1
    B, T, in_dim = x.shape
    n_layers = len(params)
    n_units = params[0][0].shape[0]

    F = _round_up(max(in_dim, n_units), 128)          # lane-dense padded feature dim
    M = B * T
    tm_eff = min(tm, _round_up(M, 8))                 # row tile, multiple of 8 sublanes
    M_pad = _round_up(M, tm_eff)

    # Activations: (M_pad, F) bf16, zero-padded rows / features.
    h = jnp.zeros((M_pad, F), jnp.bfloat16).at[:M, :in_dim].set(
        x.reshape(M, in_dim).astype(jnp.bfloat16))

    # Weights pre-transposed to (in, out), zero-padded to (F, F), stacked; biases padded.
    w_stack = jnp.zeros((n_layers, F, F), jnp.bfloat16)
    b_stack = jnp.zeros((n_layers, 1, F), jnp.float32)
    for l, (w, b) in enumerate(params):
        out_d, in_d = w.shape
        w_stack = w_stack.at[l, :in_d, :out_d].set(w.T.astype(jnp.bfloat16))
        b_stack = b_stack.at[l, 0, :out_d].set(b.astype(jnp.float32))

    seed_arr = jnp.asarray([seed], dtype=jnp.int32)

    kernel = functools.partial(_prenet_fused_kernel, float(dropout_p), n_layers,
                               M_pad * F)

    out_pad = pl.pallas_call(
        kernel,
        out_shape=jax.ShapeDtypeStruct((M_pad, F), jnp.float32),
        grid_spec=pltpu.PrefetchScalarGridSpec(
            num_scalar_prefetch=0,
            grid=(M_pad // tm_eff,),
            in_specs=[
                pl.BlockSpec(memory_space=pltpu.SMEM),                # seed (scalar)
                pl.BlockSpec((tm_eff, F), lambda i: (i, 0)),          # x row tile
                pl.BlockSpec((n_layers, F, F), lambda i: (0, 0, 0)),  # all W^T (resident)
                pl.BlockSpec((n_layers, 1, F), lambda i: (0, 0, 0)),  # all biases
            ],
            out_specs=pl.BlockSpec((tm_eff, F), lambda i: (i, 0)),
        ),
        compiler_params=pltpu.CompilerParams(
            dimension_semantics=("parallel",)),       # row tiles independent -> megacore
    )(seed_arr, h, w_stack, b_stack)

    return out_pad[:M, :n_units].reshape(B, T, n_units)


def init_prenet_params(key, in_dim, n_layers, n_units):
    """Deterministic synthetic init, PyTorch-Linear-like uniform(-1/sqrt(fan_in), +)."""
    params = []
    d_in = in_dim
    for _ in range(n_layers):
        key, kw, kb = jax.random.split(key, 3)
        bound = 1.0 / (d_in ** 0.5)
        w = jax.random.uniform(kw, (n_units, d_in), jnp.float32, -bound, bound)
        b = jax.random.uniform(kb, (n_units,), jnp.float32, -bound, bound)
        params.append((w, b))
        d_in = n_units
    return params


if __name__ == "__main__":
    # Shapes consistent with the module: Prenet(in_dim=32, n_layers=2, n_units=32,
    # dropout=0.5) applied to a (batch=2, seq=8, in_dim=32) tensor.
    B, T, IN_DIM = 2, 8, 32
    N_LAYERS, N_UNITS, DROPOUT = 2, 32, 0.5

    key = jax.random.PRNGKey(0)
    key, kx = jax.random.split(key)
    x = jax.random.normal(kx, (B, T, IN_DIM), jnp.float32)
    params = init_prenet_params(key, IN_DIM, N_LAYERS, N_UNITS)

    out = prenet_forward(x, params, DROPOUT, seed=0)
    out = jax.block_until_ready(out)
    assert out.shape == (B, T, N_UNITS)
    assert bool(jnp.all(out >= 0.0))        # ReLU (and zeroed dropout) => non-negative

    # Dropout-free numerical check against a plain-JAX reference (bf16 matmul tolerance).
    out_p0 = jax.block_until_ready(prenet_forward(x, params, 0.0, seed=0))
    h_ref = x.reshape(B * T, IN_DIM)
    for w, b in params:
        h_ref = jnp.maximum(h_ref @ w.T + b, 0.0)
    ref = h_ref.reshape(B, T, N_UNITS)
    assert bool(jnp.max(jnp.abs(out_p0 - ref)) < 5e-2), "mismatch vs reference"

    print("KERNEL_OK")
</pallas_src>

<mosaic_0001>
module attributes {stable_mosaic.version = 11 : i64} {
  func.func @_prenet_fused_kernel(%arg0: i32, %arg1: memref<1xi32, #tpu.memory_space<smem>>, %arg2: memref<16x128xbf16, #tpu.memory_space<vmem>>, %arg3: memref<2x128x128xbf16, #tpu.memory_space<vmem>>, %arg4: memref<2x1x128xf32, #tpu.memory_space<vmem>>, %arg5: memref<16x128xf32, #tpu.memory_space<vmem>>) attributes {dimension_semantics = [#tpu.dimension_semantics<parallel>], iteration_bounds = array<i64: 1>, scalar_prefetch = 0 : i64, scratch_operands = 0 : i64, tpu.core_type = #tpu.core_type<tc>, window_params = [{transform_indices = @transform_0, window_bounds = array<i64: 1>}, {transform_indices = @transform_1, window_bounds = array<i64: 16, 128>}, {pipeline_mode = #tpu.pipeline_mode<synchronous>, transform_indices = @transform_2, window_bounds = array<i64: 2, 128, 128>}, {pipeline_mode = #tpu.pipeline_mode<synchronous>, transform_indices = @transform_3, window_bounds = array<i64: 2, 1, 128>}, {transform_indices = @transform_4, window_bounds = array<i64: 16, 128>}]} {
    %c0 = arith.constant 0 : index
    %c0_0 = arith.constant 0 : index
    %0 = vector.load %arg2[%c0, %c0_0] : memref<16x128xbf16, #tpu.memory_space<vmem>>, vector<16x128xbf16>
    %c16_i32 = arith.constant 16 : i32
    %1 = arith.muli %arg0, %c16_i32 : i32
    %2 = tpu.iota {dimensions = array<i32: 0>} : vector<16x128xi32>
    %3 = vector.broadcast %1 : i32 to vector<16x128xi32>
    %4 = arith.addi %2, %3 : vector<16x128xi32>
    %5 = tpu.iota {dimensions = array<i32: 1>} : vector<16x128xi32>
    %c128_i32 = arith.constant 128 : i32
    %6 = vector.broadcast %c128_i32 : i32 to vector<16x128xi32>
    %7 = arith.muli %4, %6 : vector<16x128xi32>
    %8 = arith.addi %7, %5 : vector<16x128xi32>
    %c0_1 = arith.constant 0 : index
    %9 = memref.load %arg1[%c0_1] : memref<1xi32, #tpu.memory_space<smem>>
    %c0_2 = arith.constant 0 : index
    %c0_3 = arith.constant 0 : index
    %c0_4 = arith.constant 0 : index
    %10 = vector.load %arg3[%c0_2, %c0_3, %c0_4] : memref<2x128x128xbf16, #tpu.memory_space<vmem>>, vector<1x128x128xbf16>
    %11 = vector.shape_cast %10 : vector<1x128x128xbf16> to vector<128x128xbf16>
    %cst = arith.constant dense<0.000000e+00> : vector<16x128xf32>
    %12 = tpu.matmul %0, %11, %cst {dimension_numbers = #tpu.dot_dimension_numbers<[1], [0], [0], [1], [0, 0, 1, 1], [], []>} : vector<16x128xbf16>, vector<128x128xbf16>, vector<16x128xf32> -> vector<16x128xf32>
    %c0_5 = arith.constant 0 : index
    %c0_6 = arith.constant 0 : index
    %c0_7 = arith.constant 0 : index
    %13 = vector.load %arg4[%c0_5, %c0_6, %c0_7] : memref<2x1x128xf32, #tpu.memory_space<vmem>>, vector<1x1x128xf32>
    %14 = vector.shape_cast %13 : vector<1x1x128xf32> to vector<1x128xf32>
    %15 = vector.broadcast %14 : vector<1x128xf32> to vector<16x128xf32>
    %16 = arith.addf %12, %15 : vector<16x128xf32>
    %cst_8 = arith.constant 0.000000e+00 : f32
    %17 = vector.broadcast %cst_8 : f32 to vector<16x128xf32>
    %18 = arith.maximumf %16, %17 : vector<16x128xf32>
    %c0_i32 = arith.constant 0 : i32
    %19 = vector.broadcast %c0_i32 : i32 to vector<16x128xi32>
    %20 = arith.addi %8, %19 : vector<16x128xi32>
    %c-1640531535_i32 = arith.constant -1640531535 : i32
    %21 = vector.broadcast %c-1640531535_i32 : i32 to vector<16x128xi32>
    %22 = arith.muli %20, %21 : vector<16x128xi32>
    %23 = vector.broadcast %9 : i32 to vector<16x128xi32>
    %24 = arith.addi %22, %23 : vector<16x128xi32>
    %c16_i32_9 = arith.constant 16 : i32
    %25 = vector.broadcast %c16_i32_9 : i32 to vector<16x128xi32>
    %26 = arith.shrui %24, %25 : vector<16x128xi32>
    %27 = arith.xori %24, %26 : vector<16x128xi32>
    %c2146121005_i32 = arith.constant 2146121005 : i32
    %28 = vector.broadcast %c2146121005_i32 : i32 to vector<16x128xi32>
    %29 = arith.muli %27, %28 : vector<16x128xi32>
    %c15_i32 = arith.constant 15 : i32
    %30 = vector.broadcast %c15_i32 : i32 to vector<16x128xi32>
    %31 = arith.shrui %29, %30 : vector<16x128xi32>
    %32 = arith.xori %29, %31 : vector<16x128xi32>
    %c-2073254261_i32 = arith.constant -2073254261 : i32
    %33 = vector.broadcast %c-2073254261_i32 : i32 to vector<16x128xi32>
    %34 = arith.muli %32, %33 : vector<16x128xi32>
    %c16_i32_10 = arith.constant 16 : i32
    %35 = vector.broadcast %c16_i32_10 : i32 to vector<16x128xi32>
    %36 = arith.shrui %34, %35 : vector<16x128xi32>
    %37 = arith.xori %34, %36 : vector<16x128xi32>
    %c-2147483648_i32 = arith.constant -2147483648 : i32
    %38 = vector.broadcast %c-2147483648_i32 : i32 to vector<16x128xi32>
    %39 = arith.cmpi uge, %37, %38 : vector<16x128xi32>
    %cst_11 = arith.constant 2.000000e+00 : f32
    %40 = vector.broadcast %cst_11 : f32 to vector<16x128xf32>
    %41 = arith.mulf %18, %40 : vector<16x128xf32>
    %cst_12 = arith.constant 0.000000e+00 : f32
    %42 = vector.broadcast %cst_12 : f32 to vector<16x128xf32>
    %43 = arith.select %39, %41, %42 : vector<16x128xi1>, vector<16x128xf32>
    %44 = arith.truncf %43 : vector<16x128xf32> to vector<16x128xbf16>
    %c1 = arith.constant 1 : index
    %c0_13 = arith.constant 0 : index
    %c0_14 = arith.constant 0 : index
    %45 = vector.load %arg3[%c1, %c0_13, %c0_14] : memref<2x128x128xbf16, #tpu.memory_space<vmem>>, vector<1x128x128xbf16>
    %46 = vector.shape_cast %45 : vector<1x128x128xbf16> to vector<128x128xbf16>
    %cst_15 = arith.constant dense<0.000000e+00> : vector<16x128xf32>
    %47 = tpu.matmul %44, %46, %cst_15 {dimension_numbers = #tpu.dot_dimension_numbers<[1], [0], [0], [1], [0, 0, 1, 1], [], []>} : vector<16x128xbf16>, vector<128x128xbf16>, vector<16x128xf32> -> vector<16x128xf32>
    %c1_16 = arith.constant 1 : index
    %c0_17 = arith.constant 0 : index
    %c0_18 = arith.constant 0 : index
    %48 = vector.load %arg4[%c1_16, %c0_17, %c0_18] : memref<2x1x128xf32, #tpu.memory_space<vmem>>, vector<1x1x128xf32>
    %49 = vector.shape_cast %48 : vector<1x1x128xf32> to vector<1x128xf32>
    %50 = vector.broadcast %49 : vector<1x128xf32> to vector<16x128xf32>
    %51 = arith.addf %47, %50 : vector<16x128xf32>
    %cst_19 = arith.constant 0.000000e+00 : f32
    %52 = vector.broadcast %cst_19 : f32 to vector<16x128xf32>
    %53 = arith.maximumf %51, %52 : vector<16x128xf32>
    %c2048_i32 = arith.constant 2048 : i32
    %54 = vector.broadcast %c2048_i32 : i32 to vector<16x128xi32>
    %55 = arith.addi %8, %54 : vector<16x128xi32>
    %c-1640531535_i32_20 = arith.constant -1640531535 : i32
    %56 = vector.broadcast %c-1640531535_i32_20 : i32 to vector<16x128xi32>
    %57 = arith.muli %55, %56 : vector<16x128xi32>
    %58 = vector.broadcast %9 : i32 to vector<16x128xi32>
    %59 = arith.addi %57, %58 : vector<16x128xi32>
    %c16_i32_21 = arith.constant 16 : i32
    %60 = vector.broadcast %c16_i32_21 : i32 to vector<16x128xi32>
    %61 = arith.shrui %59, %60 : vector<16x128xi32>
    %62 = arith.xori %59, %61 : vector<16x128xi32>
    %c2146121005_i32_22 = arith.constant 2146121005 : i32
    %63 = vector.broadcast %c2146121005_i32_22 : i32 to vector<16x128xi32>
    %64 = arith.muli %62, %63 : vector<16x128xi32>
    %c15_i32_23 = arith.constant 15 : i32
    %65 = vector.broadcast %c15_i32_23 : i32 to vector<16x128xi32>
    %66 = arith.shrui %64, %65 : vector<16x128xi32>
    %67 = arith.xori %64, %66 : vector<16x128xi32>
    %c-2073254261_i32_24 = arith.constant -2073254261 : i32
    %68 = vector.broadcast %c-2073254261_i32_24 : i32 to vector<16x128xi32>
    %69 = arith.muli %67, %68 : vector<16x128xi32>
    %c16_i32_25 = arith.constant 16 : i32
    %70 = vector.broadcast %c16_i32_25 : i32 to vector<16x128xi32>
    %71 = arith.shrui %69, %70 : vector<16x128xi32>
    %72 = arith.xori %69, %71 : vector<16x128xi32>
    %c-2147483648_i32_26 = arith.constant -2147483648 : i32
    %73 = vector.broadcast %c-2147483648_i32_26 : i32 to vector<16x128xi32>
    %74 = arith.cmpi uge, %72, %73 : vector<16x128xi32>
    %cst_27 = arith.constant 2.000000e+00 : f32
    %75 = vector.broadcast %cst_27 : f32 to vector<16x128xf32>
    %76 = arith.mulf %53, %75 : vector<16x128xf32>
    %cst_28 = arith.constant 0.000000e+00 : f32
    %77 = vector.broadcast %cst_28 : f32 to vector<16x128xf32>
    %78 = arith.select %74, %76, %77 : vector<16x128xi1>, vector<16x128xf32>
    %c0_29 = arith.constant 0 : index
    %c0_30 = arith.constant 0 : index
    %79 = vector.load %arg5[%c0_29, %c0_30] : memref<16x128xf32, #tpu.memory_space<vmem>>, vector<16x128xf32>
    tpu.vector_store %arg5[%c0_29, %c0_30], %78 {strides = array<i32>} : memref<16x128xf32, #tpu.memory_space<vmem>>, vector<16x128xf32>,
    return
  }
  func.func @transform_0(%arg0: i32) -> i32 {
    %c0_i32 = arith.constant 0 : i32
    %c0_i32_0 = arith.constant 0 : i32
    return %c0_i32 : i32
  }
  func.func @transform_1(%arg0: i32) -> (i32, i32) {
    %c0_i32 = arith.constant 0 : i32
    %c0_i32_0 = arith.constant 0 : i32
    return %arg0, %c0_i32 : i32, i32
  }
  func.func @transform_2(%arg0: i32) -> (i32, i32, i32) {
    %c0_i32 = arith.constant 0 : i32
    %c0_i32_0 = arith.constant 0 : i32
    %c0_i32_1 = arith.constant 0 : i32
    %c0_i32_2 = arith.constant 0 : i32
    return %c0_i32, %c0_i32_0, %c0_i32_1 : i32, i32, i32
  }
  func.func @transform_3(%arg0: i32) -> (i32, i32, i32) {
    %c0_i32 = arith.constant 0 : i32
    %c0_i32_0 = arith.constant 0 : i32
    %c0_i32_1 = arith.constant 0 : i32
    %c0_i32_2 = arith.constant 0 : i32
    return %c0_i32, %c0_i32_0, %c0_i32_1 : i32, i32, i32
  }
  func.func @transform_4(%arg0: i32) -> (i32, i32) {
    %c0_i32 = arith.constant 0 : i32
    %c0_i32_0 = arith.constant 0 : i32
    return %arg0, %c0_i32 : i32, i32
  }
}

</mosaic_0001>

<llo_original>
// kernel: tpu_custom_call.1
$region0: #{tpu_custom_call.1}
  #allocation0 [shape = 'u32[]', space=smem, size = 0x4, offset = 0x4, fixed_abs, tag = 'smem constant byte address 0x4 - core index']
  #allocation1 [shape = 'u32[144,128]{1,0:T(1,128)}', space=vmem, size = 0x12000, scoped, tag = 'internal scratch']
  #allocation2 [shape = 's32[1]{0:T(128)S(6)}', space=smem, size = 0x200, scoped, tag = 'scoped memory for tpu_custom_call.1']
  %s0 = inlined_call_operand.<no memory space> [shape: s32[1], index: 0, kind: input, shape index: {}]
  %s1 = inlined_call_operand.hbm [shape: bf16[16,128], index: 1, kind: input, shape index: {}]
  %s2 = inlined_call_operand.hbm [shape: bf16[2,128,128], index: 2, kind: input, shape index: {}]
  %s3 = inlined_call_operand.vmem [shape: f32[2,1,128], index: 3, kind: input, shape index: {}]
  %s4 = inlined_call_operand.hbm [shape: f32[16,128], index: 4, kind: output, shape index: {}]
  %s5 = sld [smem:[#allocation0]]
  $region34: #{tpu_custom_call.1} parent=0
    _
  %s7 = ssub.s32 1, %s5
  %s8 = scalar_select 0, %s7, %s5
  %9 = sst [smem:[#allocation2]] %s0
  $region1: #{tpu_custom_call.1} parent=0
    #allocation3 [shape = 'u8[4096]{0}', space=vmem, size = 0x1000, scoped, tag = 'input window, operand 1, single buffered']
    #allocation4 [shape = 's32[1]{0}', space=sflag, size = 0x4, scoped, tag = 'scoped memory for tpu_custom_call.1']
    #allocation5 [shape = 's32[1]{0}', space=sflag, size = 0x4, scoped, tag = 'scoped memory for tpu_custom_call.1']
    #allocation6 [shape = 'u8[65536]{0}', space=vmem, size = 0x10000, scoped, tag = 'input window, operand 2, single buffered']
    #allocation7 [shape = 's32[1]{0}', space=sflag, size = 0x4, scoped, tag = 'scoped memory for tpu_custom_call.1']
    #allocation8 [shape = 'u8[8192]{0}', space=vmem, size = 0x2000, scoped, tag = 'output window, operand 0, single buffered']
    %10 = vsyncpa [#allocation4], 0
    %11 = vsyncpa [#allocation7], 0
    %12 = vsyncpa [#allocation5], 0
    // Predicated region
    $region2: #{tpu_custom_call.1} parent=1 // pred_check
      _
    $region3: #{tpu_custom_call.1} parent=1 // pred_check_branch
      %14 = sbr.rel (0) target = $region5
    $region4: #{tpu_custom_call.1} parent=1 // pred_region
      _
    $region5: #{tpu_custom_call.1} parent=1 // pred_fallthru
      _
    // Predicated region
    $region6: #{tpu_custom_call.1} parent=1 // pred_check
      _
    $region7: #{tpu_custom_call.1} parent=1 // pred_check_branch
      %16 = sbr.rel (0) target = $region9
    $region8: #{tpu_custom_call.1} parent=1 // pred_region
      %s18 = ssub.s32 128, 128
      %19 = vsyncadd [#allocation4], %s18
      %s20 = sshll.u32 [#allocation3], 4
      %s21 = int_to_ptr.vmem [resolvable:$true] %s20
      %26 = dma.hbm_to_vmem [thread:$0]  %s1, 128, %s21, [#allocation4], 64, 64, 4
    $region9: #{tpu_custom_call.1} parent=1 // pred_fallthru
      _
    // Predicated region
    $region10: #{tpu_custom_call.1} parent=1 // pred_check
      _
    $region11: #{tpu_custom_call.1} parent=1 // pred_check_branch
      %28 = sbr.rel (0) target = $region13
    $region12: #{tpu_custom_call.1} parent=1 // pred_region
      %s30 = ssub.s32 2048, 2048
      %31 = vsyncadd [#allocation7], %s30
      %s32 = sshll.u32 [#allocation6], 4
      %s33 = int_to_ptr.vmem [resolvable:$true] %s32
      %38 = dma.hbm_to_vmem [thread:$0]  %s2, 2048, %s33, [#allocation7], 64, 64, 4
    $region13: #{tpu_custom_call.1} parent=1 // pred_fallthru
      _
    // Predicated region
    $region14: #{tpu_custom_call.1} parent=1 // pred_check
      _
    $region15: #{tpu_custom_call.1} parent=1 // pred_check_branch
      %40 = sbr.rel (0) target = $region17
    $region16: #{tpu_custom_call.1} parent=1 // pred_region
      _
    $region17: #{tpu_custom_call.1} parent=1 // pred_fallthru
      _
    // Predicated region
    $region18: #{tpu_custom_call.1} parent=1 // pred_check
      _
    $region19: #{tpu_custom_call.1} parent=1 // pred_check_branch
      %42 = sbr.rel (0) target = $region21
    $region20: #{tpu_custom_call.1} parent=1 // pred_region
      %43 = dma.done [#allocation4], 128
    $region21: #{tpu_custom_call.1} parent=1 // pred_fallthru
      _
    // Predicated region
    $region22: #{tpu_custom_call.1} parent=1 // pred_check
      _
    $region23: #{tpu_custom_call.1} parent=1 // pred_check_branch
      %45 = sbr.rel (0) target = $region25
    $region24: #{tpu_custom_call.1} parent=1 // pred_region
      %46 = dma.done [#allocation7], 2048
    $region25: #{tpu_custom_call.1} parent=1 // pred_fallthru
      _
    %v48 = vld [vmem:[#allocation3] sm:$0xf]
    %v49 = vld [vmem:[#allocation3 + $0x4] sm:$0xf]
    %s50 = smul.u32 0, 16
    %v51 = vlaneseq
    %v52 = vshrl.u32 %v51, 7
    %v53 = vadd.s32 %v52, 8
    %v54 = vstv %s50
    %v55 = vadd.s32 %v52, %v54
    %v56 = vadd.s32 %v53, %v54
    %v57 = vlaneseq
    %v58 = vand.u32 %v57, 127
    %v59 = vmul.u32 %v55, 128
    %v60 = vmul.u32 %v56, 128
    %v61 = vadd.s32 %v59, %v58
    %v62 = vadd.s32 %v60, %v58
    %s63 = sld [smem:[#allocation2]]
    %v64 = vld [vmem:[#allocation6] sm:$0xf]
    %v65 = vld [vmem:[#allocation6 + $0x4] sm:$0xf]
    %v66 = vld [vmem:[#allocation6 + $0x8] sm:$0xf]
    %v67 = vld [vmem:[#allocation6 + $0xc] sm:$0xf]
    %v68 = vld [vmem:[#allocation6 + $0x10] sm:$0xf]
    %v69 = vld [vmem:[#allocation6 + $0x14] sm:$0xf]
    %v70 = vld [vmem:[#allocation6 + $0x18] sm:$0xf]
    %v71 = vld [vmem:[#allocation6 + $0x1c] sm:$0xf]
    %v72 = vld [vmem:[#allocation6 + $0x20] sm:$0xf]
    %v73 = vld [vmem:[#allocation6 + $0x24] sm:$0xf]
    %v74 = vld [vmem:[#allocation6 + $0x28] sm:$0xf]
    %v75 = vld [vmem:[#allocation6 + $0x2c] sm:$0xf]
    %v76 = vld [vmem:[#allocation6 + $0x30] sm:$0xf]
    %v77 = vld [vmem:[#allocation6 + $0x34] sm:$0xf]
    %v78 = vld [vmem:[#allocation6 + $0x38] sm:$0xf]
    %v79 = vld [vmem:[#allocation6 + $0x3c] sm:$0xf]
    %v80 = vld [vmem:[%s3] sm:$0x1]
    %v82 = vlaneseq
    %v83 = vshrl.u32 %v82, 7
    %v84 = vsub.s32 0, %v83
    %v85 = vrot.slane %v80, %v84
    %v89 = vunpack.c.l.b16 %v48
    %v90 = vunpack.c.l.b16 %v49
    %v91 = vpack.c.b16 %v90, %v89
    %v109 = vunpack.c.l.b16 %v64
    %v110 = vunpack.c.l.b16 %v65
    %v111 = vunpack.c.l.b16 %v66
    %v112 = vunpack.c.l.b16 %v67
    %v113 = vunpack.c.l.b16 %v68
    %v114 = vunpack.c.l.b16 %v69
    %v115 = vunpack.c.l.b16 %v70
    %v116 = vunpack.c.l.b16 %v71
    %v117 = vunpack.c.l.b16 %v72
    %v118 = vunpack.c.l.b16 %v73
    %v119 = vunpack.c.l.b16 %v74
    %v120 = vunpack.c.l.b16 %v75
    %v121 = vunpack.c.l.b16 %v76
    %v122 = vunpack.c.l.b16 %v77
    %v123 = vunpack.c.l.b16 %v78
    %v124 = vunpack.c.l.b16 %v79
    %v125 = vpack.c.b16 %v110, %v109
    %v126 = vpack.c.b16 %v112, %v111
    %v127 = vpack.c.b16 %v114, %v113
    %v128 = vpack.c.b16 %v116, %v115
    %v129 = vpack.c.b16 %v118, %v117
    %v130 = vpack.c.b16 %v120, %v119
    %v131 = vpack.c.b16 %v122, %v121
    %v132 = vpack.c.b16 %v124, %v123
    %141 = vmatprep.subr.bf16.mxu0 0
    %142 = vmatpush1.bf16.msra.mxu0 %v125
    %143 = vmatprep.subr.bf16.mxu0 0
    %144 = vmatpush1.bf16.msra.mxu0 %v126
    %145 = vmatprep.subr.bf16.mxu0 0
    %146 = vmatpush1.bf16.msra.mxu0 %v127
    %147 = vmatprep.subr.bf16.mxu0 0
    %148 = vmatpush1.bf16.msra.mxu0 %v128
    %149 = vmatprep.subr.bf16.mxu0 0
    %150 = vmatpush1.bf16.msra.mxu0 %v129
    %151 = vmatprep.subr.bf16.mxu0 0
    %152 = vmatpush1.bf16.msra.mxu0 %v130
    %153 = vmatprep.subr.bf16.mxu0 0
    %154 = vmatpush1.bf16.msra.mxu0 %v131
    %155 = vmatprep.subr.bf16.mxu0 0
    %156 = vmatpush1.bf16.msra.mxu0 %v132
    %157 = vmatprep.subr.bf16.mxu0 0
    %158 = vmatpush1.bf16.msra.mxu0 0
    %159 = vmatprep.subr.bf16.mxu0 0
    %160 = vmatpush1.bf16.msra.mxu0 0
    %161 = vmatprep.subr.bf16.mxu0 0
    %162 = vmatpush1.bf16.msra.mxu0 0
    %163 = vmatprep.subr.bf16.mxu0 0
    %164 = vmatpush1.bf16.msra.mxu0 0
    %165 = vmatprep.subr.bf16.mxu0 0
    %166 = vmatpush1.bf16.msra.mxu0 0
    %167 = vmatprep.subr.bf16.mxu0 0
    %168 = vmatpush1.bf16.msra.mxu0 0
    %169 = vmatprep.subr.bf16.mxu0 0
    %170 = vmatpush1.bf16.msra.mxu0 0
    %171 = vmatprep.subr.bf16.mxu0 0
    %172 = vmatpush1.bf16.msra.mxu0 0
    %173 = vmatprep.mubr.bf16.mxu0 0
    %174 = vmatmul.mubr.bf16.gmra.mrb[0].mxu0 %v91
    %v175 = vpop.f32.mrb[0].mxu0
    %v176 = vadd.f32 %v85, %v175
    %v177 = vpop.f32.mrb[0].mxu0
    %v178 = vpop.f32.mrb[0].mxu0
    %v179 = vadd.f32 %v85, %v178
    %v180 = vpop.f32.mrb[0].mxu0
    %181 = vdwg.mxu0
    %v182 = vmax.f32 %v176, 0.0
    %v183 = vmax.f32 %v179, 0.0
    %v184 = vmul.u32 %v61, 2654435761
    %v185 = vmul.u32 %v62, 2654435761
    %v186 = vstv %s63
    %v187 = vadd.s32 %v184, %v186
    %v188 = vadd.s32 %v185, %v186
    %v189 = vshrl.u32 %v187, 16
    %v190 = vshrl.u32 %v188, 16
    %v191 = vxor.u32 %v187, %v189
    %v192 = vxor.u32 %v188, %v190
    %v193 = vmul.u32 %v191, 2146121005
    %v194 = vmul.u32 %v192, 2146121005
    %v195 = vshrl.u32 %v193, 15
    %v196 = vshrl.u32 %v194, 15
    %v197 = vxor.u32 %v193, %v195
    %v198 = vxor.u32 %v194, %v196
    %v199 = vmul.u32 %v197, 2221713035
    %v200 = vmul.u32 %v198, 2221713035
    %v201 = vshrl.u32 %v199, 16
    %v202 = vshrl.u32 %v200, 16
    %v203 = vxor.u32 %v199, %v201
    %v204 = vxor.u32 %v200, %v202
    %vm205 = vcmp.ge.u32.totalorder %v203, 2147483648
    %vm206 = vcmp.ge.u32.totalorder %v204, 2147483648
    %v207 = vmul.f32 %v182, 2.0
    %v208 = vmul.f32 %v183, 2.0
    %v209 = vsel %vm205, %v207, 0.0
    %v210 = vsel %vm206, %v208, 0.0
    %v211 = vpack.c.bf16 %v210, %v209
    %s212 = scalar_lea.vmem [#allocation6], 64
    %v213 = vld [vmem:[%s212] sm:$0xf]
    %v214 = vld [vmem:[%s212 + $0x4] sm:$0xf]
    %v215 = vld [vmem:[%s212 + $0x8] sm:$0xf]
    %v216 = vld [vmem:[%s212 + $0xc] sm:$0xf]
    %v217 = vld [vmem:[%s212 + $0x10] sm:$0xf]
    %v218 = vld [vmem:[%s212 + $0x14] sm:$0xf]
    %v219 = vld [vmem:[%s212 + $0x18] sm:$0xf]
    %v220 = vld [vmem:[%s212 + $0x1c] sm:$0xf]
    %v221 = vld [vmem:[%s212 + $0x20] sm:$0xf]
    %v222 = vld [vmem:[%s212 + $0x24] sm:$0xf]
    %v223 = vld [vmem:[%s212 + $0x28] sm:$0xf]
    %v224 = vld [vmem:[%s212 + $0x2c] sm:$0xf]
    %v225 = vld [vmem:[%s212 + $0x30] sm:$0xf]
    %v226 = vld [vmem:[%s212 + $0x34] sm:$0xf]
    %v227 = vld [vmem:[%s212 + $0x38] sm:$0xf]
    %v228 = vld [vmem:[%s212 + $0x3c] sm:$0xf]
    %s229 = scalar_lea.vmem %s3, 1
    %v230 = vld [vmem:[%s229] sm:$0x1]
    %v232 = vlaneseq
    %v233 = vshrl.u32 %v232, 7
    %v234 = vsub.s32 0, %v233
    %v235 = vrot.slane %v230, %v234
    %v253 = vunpack.c.l.b16 %v213
    %v254 = vunpack.c.l.b16 %v214
    %v255 = vunpack.c.l.b16 %v215
    %v256 = vunpack.c.l.b16 %v216
    %v257 = vunpack.c.l.b16 %v217
    %v258 = vunpack.c.l.b16 %v218
    %v259 = vunpack.c.l.b16 %v219
    %v260 = vunpack.c.l.b16 %v220
    %v261 = vunpack.c.l.b16 %v221
    %v262 = vunpack.c.l.b16 %v222
    %v263 = vunpack.c.l.b16 %v223
    %v264 = vunpack.c.l.b16 %v224
    %v265 = vunpack.c.l.b16 %v225
    %v266 = vunpack.c.l.b16 %v226
    %v267 = vunpack.c.l.b16 %v227
    %v268 = vunpack.c.l.b16 %v228
    %v269 = vpack.c.b16 %v254, %v253
    %v270 = vpack.c.b16 %v256, %v255
    %v271 = vpack.c.b16 %v258, %v257
    %v272 = vpack.c.b16 %v260, %v259
    %v273 = vpack.c.b16 %v262, %v261
    %v274 = vpack.c.b16 %v264, %v263
    %v275 = vpack.c.b16 %v266, %v265
    %v276 = vpack.c.b16 %v268, %v267
    %285 = vmatprep.subr.bf16.mxu0 0
    %286 = vmatpush1.bf16.msra.mxu0 %v269
    %287 = vmatprep.subr.bf16.mxu0 0
    %288 = vmatpush1.bf16.msra.mxu0 %v270
    %289 = vmatprep.subr.bf16.mxu0 0
    %290 = vmatpush1.bf16.msra.mxu0 %v271
    %291 = vmatprep.subr.bf16.mxu0 0
    %292 = vmatpush1.bf16.msra.mxu0 %v272
    %293 = vmatprep.subr.bf16.mxu0 0
    %294 = vmatpush1.bf16.msra.mxu0 %v273
    %295 = vmatprep.subr.bf16.mxu0 0
    %296 = vmatpush1.bf16.msra.mxu0 %v274
    %297 = vmatprep.subr.bf16.mxu0 0
    %298 = vmatpush1.bf16.msra.mxu0 %v275
    %299 = vmatprep.subr.bf16.mxu0 0
    %300 = vmatpush1.bf16.msra.mxu0 %v276
    %301 = vmatprep.subr.bf16.mxu0 0
    %302 = vmatpush1.bf16.msra.mxu0 0
    %303 = vmatprep.subr.bf16.mxu0 0
    %304 = vmatpush1.bf16.msra.mxu0 0
    %305 = vmatprep.subr.bf16.mxu0 0
    %306 = vmatpush1.bf16.msra.mxu0 0
    %307 = vmatprep.subr.bf16.mxu0 0
    %308 = vmatpush1.bf16.msra.mxu0 0
    %309 = vmatprep.subr.bf16.mxu0 0
    %310 = vmatpush1.bf16.msra.mxu0 0
    %311 = vmatprep.subr.bf16.mxu0 0
    %312 = vmatpush1.bf16.msra.mxu0 0
    %313 = vmatprep.subr.bf16.mxu0 0
    %314 = vmatpush1.bf16.msra.mxu0 0
    %315 = vmatprep.subr.bf16.mxu0 0
    %316 = vmatpush1.bf16.msra.mxu0 0
    %317 = vmatprep.mubr.bf16.mxu0 0
    %318 = vmatmul.mubr.bf16.gmra.mrb[0].mxu0 %v211
    %v319 = vpop.f32.mrb[0].mxu0
    %v320 = vadd.f32 %v235, %v319
    %v321 = vpop.f32.mrb[0].mxu0
    %v322 = vpop.f32.mrb[0].mxu0
    %v323 = vadd.f32 %v235, %v322
    %v324 = vpop.f32.mrb[0].mxu0
    %325 = vdwg.mxu0
    %v326 = vmax.f32 %v320, 0.0
    %v327 = vmax.f32 %v323, 0.0
    %v328 = vadd.s32 %v61, 2048
    %v329 = vadd.s32 %v62, 2048
    %v330 = vmul.u32 %v328, 2654435761
    %v331 = vmul.u32 %v329, 2654435761
    %v332 = vadd.s32 %v330, %v186
    %v333 = vadd.s32 %v331, %v186
    %v334 = vshrl.u32 %v332, 16
    %v335 = vshrl.u32 %v333, 16
    %v336 = vxor.u32 %v332, %v334
    %v337 = vxor.u32 %v333, %v335
    %v338 = vmul.u32 %v336, 2146121005
    %v339 = vmul.u32 %v337, 2146121005
    %v340 = vshrl.u32 %v338, 15
    %v341 = vshrl.u32 %v339, 15
    %v342 = vxor.u32 %v338, %v340
    %v343 = vxor.u32 %v339, %v341
    %v344 = vmul.u32 %v342, 2221713035
    %v345 = vmul.u32 %v343, 2221713035
    %v346 = vshrl.u32 %v344, 16
    %v347 = vshrl.u32 %v345, 16
    %v348 = vxor.u32 %v344, %v346
    %v349 = vxor.u32 %v345, %v347
    %vm350 = vcmp.ge.u32.totalorder %v348, 2147483648
    %vm351 = vcmp.ge.u32.totalorder %v349, 2147483648
    %v352 = vmul.f32 %v326, 2.0
    %v353 = vmul.f32 %v327, 2.0
    %v354 = vsel %vm350, %v352, 0.0
    %v355 = vsel %vm351, %v353, 0.0
    %356 = vst [vmem:[#allocation8] sm:$0xff] %v354
    %357 = vst [vmem:[#allocation8 + $0x8] sm:$0xff] %v355
    // Predicated region
    $region26: #{tpu_custom_call.1} parent=1 // pred_check
      _
    $region27: #{tpu_custom_call.1} parent=1 // pred_check_branch
      %359 = sbr.rel (0) target = $region29
    $region28: #{tpu_custom_call.1} parent=1 // pred_region
      %s361 = ssub.s32 256, 256
      %362 = vsyncadd [#allocation5], %s361
      %s363 = sshll.u32 [#allocation8], 4
      %s364 = int_to_ptr.vmem [resolvable:$true] %s363
      %369 = dma.vmem_to_hbm [thread:$0]  %s364, 256, %s4, [#allocation5], 128, 128, 8
    $region29: #{tpu_custom_call.1} parent=1 // pred_fallthru
      _
    // Predicated region
    $region30: #{tpu_custom_call.1} parent=1 // pred_check
      _
    $region31: #{tpu_custom_call.1} parent=1 // pred_check_branch
      %371 = sbr.rel (0) target = $region33
    $region32: #{tpu_custom_call.1} parent=1 // pred_region
      %372 = dma.done [#allocation5], 256
    $region33: #{tpu_custom_call.1} parent=1 // pred_fallthru
      _
    %373 = vsyncpa [#allocation4], 1
    %374 = vsyncpa [#allocation7], 1
    %375 = vsyncpa [#allocation5], 1

</llo_original>
